<compile_context>
chip_gen: v7x
topology: tpu7x:2x2x1
jax: 0.10.0
libtpu: 0.0.40
codegen_flags: <defaults>
</compile_context>

<pallas_src>
import math

import jax
import jax.numpy as jnp
from jax.experimental import pallas as pl
from jax.experimental.pallas import tpu as pltpu


# ----------------------------- in-kernel helpers -----------------------------

def _layer_norm(x, gamma, beta, eps=1e-5):
    # torch.nn.LayerNorm over the last dim (biased variance, eps inside sqrt)
    mean = jnp.mean(x, axis=-1, keepdims=True)
    var = jnp.mean(jnp.square(x - mean), axis=-1, keepdims=True)
    return (x - mean) * jax.lax.rsqrt(var + eps) * gamma + beta


def _gelu_exact(x):
    # F.gelu default = exact (erf-based) GELU
    return 0.5 * x * (1.0 + jax.lax.erf(x * (1.0 / math.sqrt(2.0))))


# ------------------------------- Pallas kernels -------------------------------

def qkv_kernel(x_ref, g_ref, b_ref, wqkv_ref, bqkv_ref, q_ref, k_ref, v_ref):
    """pre_norm + fused Q/K/V projections on a (rows, C) token tile."""
    xn = _layer_norm(x_ref[...], g_ref[...], b_ref[...])       # fp32 statistics
    xn_b = xn.astype(jnp.bfloat16)                              # bf16 MXU operand
    for i, out_ref in enumerate((q_ref, k_ref, v_ref)):
        y = jnp.dot(xn_b, wqkv_ref[i], preferred_element_type=jnp.float32)
        out_ref[...] = (y + bqkv_ref[i]).astype(out_ref.dtype)  # bf16 out


def attn_ffn_kernel(x_ref, q_ref, k_ref, v_ref, wph_ref, bp_ref,
                    g1_ref, b1n_ref, w1_ref, b1_ref, w2_ref, b2_ref, o_ref):
    """attention + (head-merge fused into proj) + residual + norm1 + FFN + residual."""
    x = x_ref[0]                                   # (N, C)  fp32 residual input
    q = q_ref[0]                                   # (H, N, Hd) bf16, 1/sqrt(Hd) pre-folded
    k = k_ref[0]                                   # (H, N, Hd) bf16
    v = v_ref[0]                                   # (H, N, Hd) bf16

    # scores + softmax (dim=-1), statistics kept in fp32
    s = jnp.einsum('hnd,hmd->hnm', q, k, preferred_element_type=jnp.float32)
    s = s - jnp.max(s, axis=-1, keepdims=True)
    p = jnp.exp(s)
    denom = jnp.sum(p, axis=-1, keepdims=True)
    p = p * pl.reciprocal(denom, approx=True)      # EUP vrcp, VALU stays free

    o = jnp.einsum('hnm,hmd->hnd', p.astype(jnp.bfloat16), v,
                   preferred_element_type=jnp.float32)          # (H, N, Hd)

    # Head merge fused into the output projection:
    #   merged(N, C) @ Wp == sum_h  o[h] @ Wp[h*Hd:(h+1)*Hd, :]
    # wph_ref holds Wp reshaped host-side to (H, Hd, C).
    mha = jnp.sum(
        jnp.einsum('hnd,hdc->hnc', o.astype(jnp.bfloat16), wph_ref[...],
                   preferred_element_type=jnp.float32),
        axis=0) + bp_ref[...]                                   # (N, C)

    h = x + mha                                    # out = x + mha         (fp32)
    h = _layer_norm(h, g1_ref[...], b1n_ref[...])  # norm1                 (fp32)

    f = jnp.dot(h.astype(jnp.bfloat16), w1_ref[...],
                preferred_element_type=jnp.float32) + b1_ref[...]
    f = _gelu_exact(f)                             # exact erf GELU        (fp32)
    f = jnp.dot(f.astype(jnp.bfloat16), w2_ref[...],
                preferred_element_type=jnp.float32) + b2_ref[...]
    o_ref[0] = (h + f).astype(o_ref.dtype)         # out + out2


# --------------------------------- wrapper ------------------------------------

def transformer_encoder_layer(x, params, num_heads):
    B, N, C = x.shape
    Hd = C // num_heads
    Fdim = params["w1"].shape[1]
    inv_scale = 1.0 / float(Hd ** 0.5)
    bf16 = jnp.bfloat16

    # Host-side packing (free under jit):
    #   * attention scale folded into the Q projection weight & bias
    #   * all matmul weights cast to bf16; biases / LN params stay fp32
    w_qkv = jnp.stack([params["wq"] * inv_scale, params["wk"], params["wv"]],
                      axis=0).astype(bf16)                          # (3, C, C) bf16
    b_qkv = jnp.stack([params["bq"] * inv_scale, params["bk"], params["bv"]],
                      axis=0)                                       # (3, 1, C) fp32
    wp_h = params["wp"].reshape(num_heads, Hd, C).astype(bf16)      # (H, Hd, C)
    w1 = params["w1"].astype(bf16)
    w2 = params["w2"].astype(bf16)

    def const(shape):
        return pl.BlockSpec(shape, lambda *_, _n=len(shape): (0,) * _n)

    cparams = pltpu.CompilerParams(
        dimension_semantics=("parallel",),
        vmem_limit_bytes=32 * 1024 * 1024,
    )

    # ---- kernel 1: pre_norm + fused QKV projection over flattened tokens ----
    BN = B * N
    # TODO(synk): at production sizes pick a 8-aligned row tile dividing B*N.
    row_tile = 256 if BN % 256 == 0 else BN
    x2d = x.reshape(BN, C)
    row_spec = pl.BlockSpec((row_tile, C), lambda i: (i, 0))

    q2, k2, v2 = pl.pallas_call(
        qkv_kernel,
        out_shape=tuple(jax.ShapeDtypeStruct((BN, C), bf16) for _ in range(3)),
        grid=(pl.cdiv(BN, row_tile),),
        in_specs=[row_spec,
                  const((1, C)), const((1, C)),
                  const((3, C, C)), const((3, 1, C))],
        out_specs=[row_spec, row_spec, row_spec],
        compiler_params=cparams,
    )(x2d, params["pre_g"], params["pre_b"], w_qkv, b_qkv)

    # PyTorch-exact flat head split q.reshape(B, H, N, C//H): pure metadata
    # reshape at the JAX level (same flat layout as (B, N, C)).
    qh = q2.reshape(B, num_heads, N, Hd)
    kh = k2.reshape(B, num_heads, N, Hd)
    vh = v2.reshape(B, num_heads, N, Hd)

    perb = pl.BlockSpec((1, N, C), lambda b: (b, 0, 0))
    perb_h = pl.BlockSpec((1, num_heads, N, Hd), lambda b: (b, 0, 0, 0))

    # ---- kernel 2: attention + proj(+merge) + residual + norm1 + FFN + residual ----
    out = pl.pallas_call(
        attn_ffn_kernel,
        out_shape=jax.ShapeDtypeStruct((B, N, C), jnp.float32),
        grid=(B,),
        in_specs=[perb, perb_h, perb_h, perb_h,
                  const((num_heads, Hd, C)), const((1, C)),
                  const((1, C)), const((1, C)),
                  const((C, Fdim)), const((1, Fdim)),
                  const((Fdim, C)), const((1, C))],
        out_specs=perb,
        compiler_params=cparams,
    )(x, qh, kh, vh, wp_h, params["bp"], params["n1_g"], params["n1_b"],
      w1, params["b1"], w2, params["b2"])
    return out


# ------------------------- pure-JAX reference (oracle) -------------------------

def reference_forward(x, params, num_heads):
    B, N, C = x.shape
    Hd = C // num_heads
    scale = Hd ** 0.5

    def ln(v, g, b):
        m = jnp.mean(v, axis=-1, keepdims=True)
        var = jnp.mean((v - m) ** 2, axis=-1, keepdims=True)
        return (v - m) / jnp.sqrt(var + 1e-5) * g + b

    xn = ln(x, params["pre_g"][0], params["pre_b"][0])
    q = (xn @ params["wq"] + params["bq"][0]).reshape(B, num_heads, N, Hd)
    k = (xn @ params["wk"] + params["bk"][0]).reshape(B, num_heads, N, Hd)
    v = (xn @ params["wv"] + params["bv"][0]).reshape(B, num_heads, N, Hd)
    attn = jnp.einsum('bhnd,bhmd->bhnm', q, k) / scale
    attn = jax.nn.softmax(attn, axis=-1)
    o = jnp.einsum('bhnm,bhmd->bhnd', attn, v).transpose(0, 2, 1, 3).reshape(B, N, C)
    mha = o @ params["wp"] + params["bp"][0]
    out = x + mha
    out = ln(out, params["n1_g"][0], params["n1_b"][0])
    f = out @ params["w1"] + params["b1"][0]
    f = 0.5 * f * (1.0 + jax.scipy.special.erf(f / jnp.sqrt(2.0)))
    f = f @ params["w2"] + params["b2"][0]
    return out + f


# ----------------------------------- main --------------------------------------

if __name__ == "__main__":
    B, N, d_model, nhead, dim_ff = 2, 8, 32, 4, 64

    key = jax.random.PRNGKey(0)
    keys = jax.random.split(key, 16)

    def w(k, shape, s=0.05):
        return (s * jax.random.normal(k, shape)).astype(jnp.float32)

    params = {
        "pre_g": (1.0 + w(keys[0], (1, d_model))),
        "pre_b": w(keys[1], (1, d_model)),
        "wq": w(keys[2], (d_model, d_model)), "bq": w(keys[3], (1, d_model)),
        "wk": w(keys[4], (d_model, d_model)), "bk": w(keys[5], (1, d_model)),
        "wv": w(keys[6], (d_model, d_model)), "bv": w(keys[7], (1, d_model)),
        "wp": w(keys[8], (d_model, d_model)), "bp": w(keys[9], (1, d_model)),
        "n1_g": (1.0 + w(keys[10], (1, d_model))),
        "n1_b": w(keys[11], (1, d_model)),
        "w1": w(keys[12], (d_model, dim_ff)), "b1": w(keys[13], (1, dim_ff)),
        "w2": w(keys[14], (dim_ff, d_model)), "b2": w(keys[15], (1, d_model)),
    }

    x = jax.random.normal(jax.random.PRNGKey(42), (B, N, d_model), dtype=jnp.float32)

    out = transformer_encoder_layer(x, params, num_heads=nhead)
    out = jax.block_until_ready(out)

    ref = jax.block_until_ready(reference_forward(x, params, num_heads=nhead))
    assert out.shape == (B, N, d_model)
    # bf16 MXU operands (fp32 accumulation / fp32 LN & softmax stats) vs fp32 oracle.
    assert bool(jnp.allclose(out, ref, atol=5e-3, rtol=5e-3)), "mismatch vs reference"

    print("KERNEL_OK")
</pallas_src>

<mosaic_0001>
module attributes {stable_mosaic.version = 11 : i64} {
  func.func @qkv_kernel(%arg0: i32, %arg1: memref<16x32xf32, #tpu.memory_space<vmem>>, %arg2: memref<1x32xf32, #tpu.memory_space<vmem>>, %arg3: memref<1x32xf32, #tpu.memory_space<vmem>>, %arg4: memref<3x32x32xbf16, #tpu.memory_space<vmem>>, %arg5: memref<3x1x32xf32, #tpu.memory_space<vmem>>, %arg6: memref<16x32xbf16, #tpu.memory_space<vmem>>, %arg7: memref<16x32xbf16, #tpu.memory_space<vmem>>, %arg8: memref<16x32xbf16, #tpu.memory_space<vmem>>) attributes {dimension_semantics = [#tpu.dimension_semantics<parallel>], iteration_bounds = array<i64: 1>, scalar_prefetch = 0 : i64, scratch_operands = 0 : i64, tpu.core_type = #tpu.core_type<tc>, window_params = [{transform_indices = @transform_0, window_bounds = array<i64: 16, 32>}, {pipeline_mode = #tpu.pipeline_mode<synchronous>, transform_indices = @transform_1, window_bounds = array<i64: 1, 32>}, {pipeline_mode = #tpu.pipeline_mode<synchronous>, transform_indices = @transform_2, window_bounds = array<i64: 1, 32>}, {pipeline_mode = #tpu.pipeline_mode<synchronous>, transform_indices = @transform_3, window_bounds = array<i64: 3, 32, 32>}, {pipeline_mode = #tpu.pipeline_mode<synchronous>, transform_indices = @transform_4, window_bounds = array<i64: 3, 1, 32>}, {transform_indices = @transform_5, window_bounds = array<i64: 16, 32>}, {transform_indices = @transform_6, window_bounds = array<i64: 16, 32>}, {transform_indices = @transform_7, window_bounds = array<i64: 16, 32>}]} {
    %c0 = arith.constant 0 : index
    %c0_0 = arith.constant 0 : index
    %0 = vector.load %arg1[%c0, %c0_0] : memref<16x32xf32, #tpu.memory_space<vmem>>, vector<16x32xf32>
    %c0_1 = arith.constant 0 : index
    %c0_2 = arith.constant 0 : index
    %1 = vector.load %arg2[%c0_1, %c0_2] : memref<1x32xf32, #tpu.memory_space<vmem>>, vector<1x32xf32>
    %c0_3 = arith.constant 0 : index
    %c0_4 = arith.constant 0 : index
    %2 = vector.load %arg3[%c0_3, %c0_4] : memref<1x32xf32, #tpu.memory_space<vmem>>, vector<1x32xf32>
    %cst = arith.constant dense<0.000000e+00> : vector<16xf32>
    %3 = vector.multi_reduction <add>, %0, %cst [1] : vector<16x32xf32> to vector<16xf32>
    %4 = vector.shape_cast %3 : vector<16xf32> to vector<16x1xf32>
    %cst_5 = arith.constant 3.200000e+01 : f32
    %5 = vector.broadcast %cst_5 : f32 to vector<16x1xf32>
    %6 = arith.divf %4, %5 : vector<16x1xf32>
    %7 = vector.broadcast %6 : vector<16x1xf32> to vector<16x32xf32>
    %8 = arith.subf %0, %7 : vector<16x32xf32>
    %9 = arith.mulf %8, %8 : vector<16x32xf32>
    %cst_6 = arith.constant dense<0.000000e+00> : vector<16xf32>
    %10 = vector.multi_reduction <add>, %9, %cst_6 [1] : vector<16x32xf32> to vector<16xf32>
    %11 = vector.shape_cast %10 : vector<16xf32> to vector<16x1xf32>
    %cst_7 = arith.constant 3.200000e+01 : f32
    %12 = vector.broadcast %cst_7 : f32 to vector<16x1xf32>
    %13 = arith.divf %11, %12 : vector<16x1xf32>
    %14 = vector.broadcast %6 : vector<16x1xf32> to vector<16x32xf32>
    %15 = arith.subf %0, %14 : vector<16x32xf32>
    %cst_8 = arith.constant 9.99999974E-6 : f32
    %16 = vector.broadcast %cst_8 : f32 to vector<16x1xf32>
    %17 = arith.addf %13, %16 : vector<16x1xf32>
    %18 = math.rsqrt %17 : vector<16x1xf32>
    %19 = vector.broadcast %18 : vector<16x1xf32> to vector<16x32xf32>
    %20 = arith.mulf %15, %19 : vector<16x32xf32>
    %21 = vector.broadcast %1 : vector<1x32xf32> to vector<16x32xf32>
    %22 = arith.mulf %20, %21 : vector<16x32xf32>
    %23 = vector.broadcast %2 : vector<1x32xf32> to vector<16x32xf32>
    %24 = arith.addf %22, %23 : vector<16x32xf32>
    %25 = arith.truncf %24 : vector<16x32xf32> to vector<16x32xbf16>
    %c0_9 = arith.constant 0 : index
    %c0_10 = arith.constant 0 : index
    %c0_11 = arith.constant 0 : index
    %26 = vector.load %arg4[%c0_9, %c0_10, %c0_11] : memref<3x32x32xbf16, #tpu.memory_space<vmem>>, vector<1x32x32xbf16>
    %27 = vector.shape_cast %26 : vector<1x32x32xbf16> to vector<32x32xbf16>
    %cst_12 = arith.constant dense<0.000000e+00> : vector<16x32xf32>
    %28 = tpu.matmul %25, %27, %cst_12 {dimension_numbers = #tpu.dot_dimension_numbers<[1], [0], [0], [1], [0, 0, 1, 1], [], []>} : vector<16x32xbf16>, vector<32x32xbf16>, vector<16x32xf32> -> vector<16x32xf32>
    %c0_13 = arith.constant 0 : index
    %c0_14 = arith.constant 0 : index
    %c0_15 = arith.constant 0 : index
    %29 = vector.load %arg5[%c0_13, %c0_14, %c0_15] : memref<3x1x32xf32, #tpu.memory_space<vmem>>, vector<1x1x32xf32>
    %30 = vector.shape_cast %29 : vector<1x1x32xf32> to vector<1x32xf32>
    %31 = vector.broadcast %30 : vector<1x32xf32> to vector<16x32xf32>
    %32 = arith.addf %28, %31 : vector<16x32xf32>
    %33 = arith.truncf %32 : vector<16x32xf32> to vector<16x32xbf16>
    %c0_16 = arith.constant 0 : index
    %c0_17 = arith.constant 0 : index
    %34 = vector.load %arg6[%c0_16, %c0_17] : memref<16x32xbf16, #tpu.memory_space<vmem>>, vector<16x32xbf16>
    tpu.vector_store %arg6[%c0_16, %c0_17], %33 {strides = array<i32>} : memref<16x32xbf16, #tpu.memory_space<vmem>>, vector<16x32xbf16>,
    %c1 = arith.constant 1 : index
    %c0_18 = arith.constant 0 : index
    %c0_19 = arith.constant 0 : index
    %35 = vector.load %arg4[%c1, %c0_18, %c0_19] : memref<3x32x32xbf16, #tpu.memory_space<vmem>>, vector<1x32x32xbf16>
    %36 = vector.shape_cast %35 : vector<1x32x32xbf16> to vector<32x32xbf16>
    %cst_20 = arith.constant dense<0.000000e+00> : vector<16x32xf32>
    %37 = tpu.matmul %25, %36, %cst_20 {dimension_numbers = #tpu.dot_dimension_numbers<[1], [0], [0], [1], [0, 0, 1, 1], [], []>} : vector<16x32xbf16>, vector<32x32xbf16>, vector<16x32xf32> -> vector<16x32xf32>
    %c1_21 = arith.constant 1 : index
    %c0_22 = arith.constant 0 : index
    %c0_23 = arith.constant 0 : index
    %38 = vector.load %arg5[%c1_21, %c0_22, %c0_23] : memref<3x1x32xf32, #tpu.memory_space<vmem>>, vector<1x1x32xf32>
    %39 = vector.shape_cast %38 : vector<1x1x32xf32> to vector<1x32xf32>
    %40 = vector.broadcast %39 : vector<1x32xf32> to vector<16x32xf32>
    %41 = arith.addf %37, %40 : vector<16x32xf32>
    %42 = arith.truncf %41 : vector<16x32xf32> to vector<16x32xbf16>
    %c0_24 = arith.constant 0 : index
    %c0_25 = arith.constant 0 : index
    %43 = vector.load %arg7[%c0_24, %c0_25] : memref<16x32xbf16, #tpu.memory_space<vmem>>, vector<16x32xbf16>
    tpu.vector_store %arg7[%c0_24, %c0_25], %42 {strides = array<i32>} : memref<16x32xbf16, #tpu.memory_space<vmem>>, vector<16x32xbf16>,
    %c2 = arith.constant 2 : index
    %c0_26 = arith.constant 0 : index
    %c0_27 = arith.constant 0 : index
    %44 = vector.load %arg4[%c2, %c0_26, %c0_27] : memref<3x32x32xbf16, #tpu.memory_space<vmem>>, vector<1x32x32xbf16>
    %45 = vector.shape_cast %44 : vector<1x32x32xbf16> to vector<32x32xbf16>
    %cst_28 = arith.constant dense<0.000000e+00> : vector<16x32xf32>
    %46 = tpu.matmul %25, %45, %cst_28 {dimension_numbers = #tpu.dot_dimension_numbers<[1], [0], [0], [1], [0, 0, 1, 1], [], []>} : vector<16x32xbf16>, vector<32x32xbf16>, vector<16x32xf32> -> vector<16x32xf32>
    %c2_29 = arith.constant 2 : index
    %c0_30 = arith.constant 0 : index
    %c0_31 = arith.constant 0 : index
    %47 = vector.load %arg5[%c2_29, %c0_30, %c0_31] : memref<3x1x32xf32, #tpu.memory_space<vmem>>, vector<1x1x32xf32>
    %48 = vector.shape_cast %47 : vector<1x1x32xf32> to vector<1x32xf32>
    %49 = vector.broadcast %48 : vector<1x32xf32> to vector<16x32xf32>
    %50 = arith.addf %46, %49 : vector<16x32xf32>
    %51 = arith.truncf %50 : vector<16x32xf32> to vector<16x32xbf16>
    %c0_32 = arith.constant 0 : index
    %c0_33 = arith.constant 0 : index
    %52 = vector.load %arg8[%c0_32, %c0_33] : memref<16x32xbf16, #tpu.memory_space<vmem>>, vector<16x32xbf16>
    tpu.vector_store %arg8[%c0_32, %c0_33], %51 {strides = array<i32>} : memref<16x32xbf16, #tpu.memory_space<vmem>>, vector<16x32xbf16>,
    return
  }
  func.func @transform_0(%arg0: i32) -> (i32, i32) {
    %c0_i32 = arith.constant 0 : i32
    %c0_i32_0 = arith.constant 0 : i32
    return %arg0, %c0_i32 : i32, i32
  }
  func.func @transform_1(%arg0: i32) -> (i32, i32) {
    %c0_i32 = arith.constant 0 : i32
    %c0_i32_0 = arith.constant 0 : i32
    %c0_i32_1 = arith.constant 0 : i32
    return %c0_i32, %c0_i32_0 : i32, i32
  }
  func.func @transform_2(%arg0: i32) -> (i32, i32) {
    %c0_i32 = arith.constant 0 : i32
    %c0_i32_0 = arith.constant 0 : i32
    %c0_i32_1 = arith.constant 0 : i32
    return %c0_i32, %c0_i32_0 : i32, i32
  }
  func.func @transform_3(%arg0: i32) -> (i32, i32, i32) {
    %c0_i32 = arith.constant 0 : i32
    %c0_i32_0 = arith.constant 0 : i32
    %c0_i32_1 = arith.constant 0 : i32
    %c0_i32_2 = arith.constant 0 : i32
    return %c0_i32, %c0_i32_0, %c0_i32_1 : i32, i32, i32
  }
  func.func @transform_4(%arg0: i32) -> (i32, i32, i32) {
    %c0_i32 = arith.constant 0 : i32
    %c0_i32_0 = arith.constant 0 : i32
    %c0_i32_1 = arith.constant 0 : i32
    %c0_i32_2 = arith.constant 0 : i32
    return %c0_i32, %c0_i32_0, %c0_i32_1 : i32, i32, i32
  }
  func.func @transform_5(%arg0: i32) -> (i32, i32) {
    %c0_i32 = arith.constant 0 : i32
    %c0_i32_0 = arith.constant 0 : i32
    return %arg0, %c0_i32 : i32, i32
  }
  func.func @transform_6(%arg0: i32) -> (i32, i32) {
    %c0_i32 = arith.constant 0 : i32
    %c0_i32_0 = arith.constant 0 : i32
    return %arg0, %c0_i32 : i32, i32
  }
  func.func @transform_7(%arg0: i32) -> (i32, i32) {
    %c0_i32 = arith.constant 0 : i32
    %c0_i32_0 = arith.constant 0 : i32
    return %arg0, %c0_i32 : i32, i32
  }
}

</mosaic_0001>

<llo_original>
// kernel: tpu_custom_call.1
$region0: #{tpu_custom_call.1}
  #allocation0 [shape = 'u32[]', space=smem, size = 0x4, offset = 0x4, fixed_abs, tag = 'smem constant byte address 0x4 - core index']
  #allocation1 [shape = 'u32[144,128]{1,0:T(1,128)}', space=vmem, size = 0x12000, scoped, tag = 'internal scratch']
  %s0 = inlined_call_operand.hbm [shape: f32[16,32], index: 0, kind: input, shape index: {}]
  %s1 = inlined_call_operand.vmem [shape: f32[1,32], index: 1, kind: input, shape index: {}]
  %s2 = inlined_call_operand.vmem [shape: f32[1,32], index: 2, kind: input, shape index: {}]
  %s3 = inlined_call_operand.hbm [shape: bf16[3,32,32], index: 3, kind: input, shape index: {}]
  %s4 = inlined_call_operand.vmem [shape: f32[3,1,32], index: 4, kind: input, shape index: {}]
  %s5 = inlined_call_operand.hbm [shape: bf16[16,32], index: 5, kind: output, shape index: {0}]
  %s6 = inlined_call_operand.hbm [shape: bf16[16,32], index: 6, kind: output, shape index: {1}]
  %s7 = inlined_call_operand.hbm [shape: bf16[16,32], index: 7, kind: output, shape index: {2}]
  %8 = xla_tuple %s5, %s6, %s7
  %s9 = sld [smem:[#allocation0]]
  $region54: #{tpu_custom_call.1} parent=0
    _
  %s11 = ssub.s32 1, %s9
  %s12 = scalar_select 0, %s11, %s9
  $region1: #{tpu_custom_call.1} parent=0
    #allocation2 [shape = 'u8[8192]{0}', space=vmem, size = 0x2000, scoped, tag = 'input window, operand 0, single buffered']
    #allocation3 [shape = 's32[1]{0}', space=sflag, size = 0x4, scoped, tag = 'scoped memory for tpu_custom_call.1']
    #allocation4 [shape = 's32[1]{0}', space=sflag, size = 0x4, scoped, tag = 'scoped memory for tpu_custom_call.1']
    #allocation5 [shape = 'u8[24576]{0}', space=vmem, size = 0x6000, scoped, tag = 'input window, operand 3, single buffered']
    #allocation6 [shape = 's32[1]{0}', space=sflag, size = 0x4, scoped, tag = 'scoped memory for tpu_custom_call.1']
    #allocation7 [shape = 'u8[4096]{0}', space=vmem, size = 0x1000, scoped, tag = 'output window, operand 0, single buffered']
    #allocation8 [shape = 'u8[4096]{0}', space=vmem, size = 0x1000, scoped, tag = 'output window, operand 1, single buffered']
    #allocation9 [shape = 's32[1]{0}', space=sflag, size = 0x4, scoped, tag = 'scoped memory for tpu_custom_call.1']
    #allocation10 [shape = 'u8[4096]{0}', space=vmem, size = 0x1000, scoped, tag = 'output window, operand 2, single buffered']
    %13 = vsyncpa [#allocation3], 0
    %14 = vsyncpa [#allocation6], 0
    %15 = vsyncpa [#allocation4], 0
    %16 = vsyncpa [#allocation9], 0
    // Predicated region
    $region2: #{tpu_custom_call.1} parent=1 // pred_check
      _
    $region3: #{tpu_custom_call.1} parent=1 // pred_check_branch
      %18 = sbr.rel (0) target = $region5
    $region4: #{tpu_custom_call.1} parent=1 // pred_region
      %s20 = ssub.s32 256, 256
      %21 = vsyncadd [#allocation3], %s20
      %s22 = sshll.u32 [#allocation2], 4
      %s23 = int_to_ptr.vmem [resolvable:$true] %s22
      %28 = dma.hbm_to_vmem [thread:$0]  %s0, 256, %s23, [#allocation3], 128, 128, 8
    $region5: #{tpu_custom_call.1} parent=1 // pred_fallthru
      _
    // Predicated region
    $region6: #{tpu_custom_call.1} parent=1 // pred_check
      _
    $region7: #{tpu_custom_call.1} parent=1 // pred_check_branch
      %30 = sbr.rel (0) target = $region9
    $region8: #{tpu_custom_call.1} parent=1 // pred_region
      _
    $region9: #{tpu_custom_call.1} parent=1 // pred_fallthru
      _
    // Predicated region
    $region10: #{tpu_custom_call.1} parent=1 // pred_check
      _
    $region11: #{tpu_custom_call.1} parent=1 // pred_check_branch
      %32 = sbr.rel (0) target = $region13
    $region12: #{tpu_custom_call.1} parent=1 // pred_region
      _
    $region13: #{tpu_custom_call.1} parent=1 // pred_fallthru
      _
    // Predicated region
    $region14: #{tpu_custom_call.1} parent=1 // pred_check
      _
    $region15: #{tpu_custom_call.1} parent=1 // pred_check_branch
      %34 = sbr.rel (0) target = $region17
    $region16: #{tpu_custom_call.1} parent=1 // pred_region
      %s36 = ssub.s32 768, 768
      %37 = vsyncadd [#allocation6], %s36
      %s38 = sshll.u32 [#allocation5], 4
      %s39 = int_to_ptr.vmem [resolvable:$true] %s38
      %44 = dma.hbm_to_vmem [thread:$0]  %s3, 768, %s39, [#allocation6], 64, 64, 4
    $region17: #{tpu_custom_call.1} parent=1 // pred_fallthru
      _
    // Predicated region
    $region18: #{tpu_custom_call.1} parent=1 // pred_check
      _
    $region19: #{tpu_custom_call.1} parent=1 // pred_check_branch
      %46 = sbr.rel (0) target = $region21
    $region20: #{tpu_custom_call.1} parent=1 // pred_region
      _
    $region21: #{tpu_custom_call.1} parent=1 // pred_fallthru
      _
    // Predicated region
    $region22: #{tpu_custom_call.1} parent=1 // pred_check
      _
    $region23: #{tpu_custom_call.1} parent=1 // pred_check_branch
      %48 = sbr.rel (0) target = $region25
    $region24: #{tpu_custom_call.1} parent=1 // pred_region
      %49 = dma.done [#allocation3], 256
    $region25: #{tpu_custom_call.1} parent=1 // pred_fallthru
      _
    // Predicated region
    $region26: #{tpu_custom_call.1} parent=1 // pred_check
      _
    $region27: #{tpu_custom_call.1} parent=1 // pred_check_branch
      %51 = sbr.rel (0) target = $region29
    $region28: #{tpu_custom_call.1} parent=1 // pred_region
      %52 = dma.done [#allocation6], 768
    $region29: #{tpu_custom_call.1} parent=1 // pred_fallthru
      _
    %v54 = vld [vmem:[#allocation2] sm:$0xff]
    %v55 = vld [vmem:[#allocation2 + $0x8] sm:$0xff]
    %v56 = vld [vmem:[%s1] sm:$0x1]
    %v57 = vld [vmem:[%s2] sm:$0x1]
    %vm58 = vcmask 261120
    %v59 = vsel %vm58, %v54, 0.0
    %60 = vadd.xlane.f32.xlu0 %v59
    %v61 = vpop.xlane.xlu0 %60
    %v62 = vsel %vm58, %v55, 0.0
    %63 = vadd.xlane.f32.xlu0 %v62
    %v64 = vpop.xlane.xlu0 %63
    %v65 = vrcp.pop 32.0
    %v66 = vmul.f32 %v61, %v65
    %v67 = vmul.f32 %v64, %v65
    %v68 = vsub.f32 %v54, %v66
    %v69 = vsub.f32 %v55, %v67
    %v70 = vmul.f32 %v68, %v68
    %v71 = vmul.f32 %v69, %v69
    %v72 = vsel %vm58, %v70, 0.0
    %73 = vadd.xlane.f32.xlu0 %v72
    %v74 = vpop.xlane.xlu0 %73
    %v75 = vsel %vm58, %v71, 0.0
    %76 = vadd.xlane.f32.xlu0 %v75
    %v77 = vpop.xlane.xlu0 %76
    %v78 = vmul.f32 %v74, %v65
    %v79 = vmul.f32 %v77, %v65
    %v80 = vadd.f32 %v78, 1e-05
    %v81 = vadd.f32 %v79, 1e-05
    %v82 = vrsqrt.pop %v80
    %v83 = vrsqrt.pop %v81
    %v84 = vmul.f32 %v68, %v82
    %v85 = vmul.f32 %v69, %v83
    %v87 = vlaneseq
    %v88 = vshrl.u32 %v87, 7
    %v89 = vsub.s32 0, %v88
    %v90 = vrot.slane %v56, %v89
    %v92 = vmul.f32 %v84, %v90
    %v93 = vmul.f32 %v85, %v90
    %v95 = vlaneseq
    %v96 = vshrl.u32 %v95, 7
    %v97 = vsub.s32 0, %v96
    %v98 = vrot.slane %v57, %v97
    %v100 = vadd.f32 %v92, %v98
    %v101 = vadd.f32 %v93, %v98
    %v102 = vpack.c.bf16 %v101, %v100
    %v103 = vld [vmem:[#allocation5] sm:$0xf]
    %v104 = vld [vmem:[#allocation5 + $0x4] sm:$0xf]
    %v105 = vld [vmem:[#allocation5 + $0x8] sm:$0xf]
    %v106 = vld [vmem:[#allocation5 + $0xc] sm:$0xf]
    %v107 = vld [vmem:[%s4] sm:$0x1]
    %v109 = vlaneseq
    %v110 = vshrl.u32 %v109, 7
    %v111 = vsub.s32 0, %v110
    %v112 = vrot.slane %v107, %v111
    %v118 = vunpack.c.l.b16 %v103
    %v119 = vunpack.c.l.b16 %v104
    %v120 = vunpack.c.l.b16 %v105
    %v121 = vunpack.c.l.b16 %v106
    %v122 = vpack.c.b16 %v119, %v118
    %v123 = vpack.c.b16 %v121, %v120
    %v127 = vsel %vm58, %v102, 0
    %129 = vmatprep.subr.bf16.mxu0 0
    %130 = vmatpush1.bf16.msra.mxu0 %v122
    %131 = vmatprep.subr.bf16.mxu0 0
    %132 = vmatpush1.bf16.msra.mxu0 %v123
    %133 = vmatprep.subr.bf16.mxu0 0
    %134 = vmatpush1.bf16.msra.mxu0 0
    %135 = vmatprep.subr.bf16.mxu0 0
    %136 = vmatpush1.bf16.msra.mxu0 0
    %137 = vmatprep.subr.bf16.mxu0 0
    %138 = vmatpush1.bf16.msra.mxu0 0
    %139 = vmatprep.subr.bf16.mxu0 0
    %140 = vmatpush1.bf16.msra.mxu0 0
    %141 = vmatprep.subr.bf16.mxu0 0
    %142 = vmatpush1.bf16.msra.mxu0 0
    %143 = vmatprep.subr.bf16.mxu0 0
    %144 = vmatpush1.bf16.msra.mxu0 0
    %145 = vmatprep.subr.bf16.mxu0 0
    %146 = vmatpush1.bf16.msra.mxu0 0
    %147 = vmatprep.subr.bf16.mxu0 0
    %148 = vmatpush1.bf16.msra.mxu0 0
    %149 = vmatprep.subr.bf16.mxu0 0
    %150 = vmatpush1.bf16.msra.mxu0 0
    %151 = vmatprep.subr.bf16.mxu0 0
    %152 = vmatpush1.bf16.msra.mxu0 0
    %153 = vmatprep.subr.bf16.mxu0 0
    %154 = vmatpush1.bf16.msra.mxu0 0
    %155 = vmatprep.subr.bf16.mxu0 0
    %156 = vmatpush1.bf16.msra.mxu0 0
    %157 = vmatprep.subr.bf16.mxu0 0
    %158 = vmatpush1.bf16.msra.mxu0 0
    %159 = vmatprep.subr.bf16.mxu0 0
    %160 = vmatpush1.bf16.msra.mxu0 0
    %161 = vmatprep.mubr.bf16.mxu0 0
    %162 = vmatmul.mubr.bf16.gmra.mrb[0].mxu0 %v127
    %v163 = vpop.f32.mrb[0].mxu0
    %v164 = vadd.f32 %v112, %v163
    %v165 = vpop.f32.mrb[0].mxu0
    %v166 = vpop.f32.mrb[0].mxu0
    %v167 = vadd.f32 %v112, %v166
    %v168 = vpop.f32.mrb[0].mxu0
    %169 = vdwg.mxu0
    %v170 = vpack.c.bf16 %v167, %v164
    %v172 = vunpack.c.l.b16 %v170
    %v173 = vunpack.c.h.b16 %v170
    %v174 = vpack.c.b16 %v172, %v172
    %v175 = vpack.c.b16 %v173, %v173
    %vm178 = vcmask 257024
    %179 = vst.msk [vmem:[#allocation7] sm:$0xf] %vm178, %v174
    %180 = vst.msk [vmem:[#allocation7 + $0x4] sm:$0xf] %vm178, %v175
    %s181 = scalar_lea.vmem [#allocation5], 16
    %v182 = vld [vmem:[%s181] sm:$0xf]
    %v183 = vld [vmem:[%s181 + $0x4] sm:$0xf]
    %v184 = vld [vmem:[%s181 + $0x8] sm:$0xf]
    %v185 = vld [vmem:[%s181 + $0xc] sm:$0xf]
    %s186 = scalar_lea.vmem %s4, 1
    %v187 = vld [vmem:[%s186] sm:$0x1]
    %v189 = vlaneseq
    %v190 = vshrl.u32 %v189, 7
    %v191 = vsub.s32 0, %v190
    %v192 = vrot.slane %v187, %v191
    %v198 = vunpack.c.l.b16 %v182
    %v199 = vunpack.c.l.b16 %v183
    %v200 = vunpack.c.l.b16 %v184
    %v201 = vunpack.c.l.b16 %v185
    %v202 = vpack.c.b16 %v199, %v198
    %v203 = vpack.c.b16 %v201, %v200
    %206 = vmatprep.subr.bf16.mxu0 0
    %207 = vmatpush1.bf16.msra.mxu0 %v202
    %208 = vmatprep.subr.bf16.mxu0 0
    %209 = vmatpush1.bf16.msra.mxu0 %v203
    %210 = vmatprep.subr.bf16.mxu0 0
    %211 = vmatpush1.bf16.msra.mxu0 0
    %212 = vmatprep.subr.bf16.mxu0 0
    %213 = vmatpush1.bf16.msra.mxu0 0
    %214 = vmatprep.subr.bf16.mxu0 0
    %215 = vmatpush1.bf16.msra.mxu0 0
    %216 = vmatprep.subr.bf16.mxu0 0
    %217 = vmatpush1.bf16.msra.mxu0 0
    %218 = vmatprep.subr.bf16.mxu0 0
    %219 = vmatpush1.bf16.msra.mxu0 0
    %220 = vmatprep.subr.bf16.mxu0 0
    %221 = vmatpush1.bf16.msra.mxu0 0
    %222 = vmatprep.subr.bf16.mxu0 0
    %223 = vmatpush1.bf16.msra.mxu0 0
    %224 = vmatprep.subr.bf16.mxu0 0
    %225 = vmatpush1.bf16.msra.mxu0 0
    %226 = vmatprep.subr.bf16.mxu0 0
    %227 = vmatpush1.bf16.msra.mxu0 0
    %228 = vmatprep.subr.bf16.mxu0 0
    %229 = vmatpush1.bf16.msra.mxu0 0
    %230 = vmatprep.subr.bf16.mxu0 0
    %231 = vmatpush1.bf16.msra.mxu0 0
    %232 = vmatprep.subr.bf16.mxu0 0
    %233 = vmatpush1.bf16.msra.mxu0 0
    %234 = vmatprep.subr.bf16.mxu0 0
    %235 = vmatpush1.bf16.msra.mxu0 0
    %236 = vmatprep.subr.bf16.mxu0 0
    %237 = vmatpush1.bf16.msra.mxu0 0
    %238 = vmatprep.mubr.bf16.mxu0 0
    %239 = vmatmul.mubr.bf16.gmra.mrb[0].mxu0 %v127
    %v240 = vpop.f32.mrb[0].mxu0
    %v241 = vadd.f32 %v192, %v240
    %v242 = vpop.f32.mrb[0].mxu0
    %v243 = vpop.f32.mrb[0].mxu0
    %v244 = vadd.f32 %v192, %v243
    %v245 = vpop.f32.mrb[0].mxu0
    %246 = vdwg.mxu0
    %v247 = vpack.c.bf16 %v244, %v241
    %v249 = vunpack.c.l.b16 %v247
    %v250 = vunpack.c.h.b16 %v247
    %v251 = vpack.c.b16 %v249, %v249
    %v252 = vpack.c.b16 %v250, %v250
    %255 = vst.msk [vmem:[#allocation8] sm:$0xf] %vm178, %v251
    %256 = vst.msk [vmem:[#allocation8 + $0x4] sm:$0xf] %vm178, %v252
    %s257 = scalar_lea.vmem [#allocation5], 32
    %v258 = vld [vmem:[%s257] sm:$0xf]
    %v259 = vld [vmem:[%s257 + $0x4] sm:$0xf]
    %v260 = vld [vmem:[%s257 + $0x8] sm:$0xf]
    %v261 = vld [vmem:[%s257 + $0xc] sm:$0xf]
    %s262 = scalar_lea.vmem %s4, 2
    %v263 = vld [vmem:[%s262] sm:$0x1]
    %v265 = vlaneseq
    %v266 = vshrl.u32 %v265, 7
    %v267 = vsub.s32 0, %v266
    %v268 = vrot.slane %v263, %v267
    %v274 = vunpack.c.l.b16 %v258
    %v275 = vunpack.c.l.b16 %v259
    %v276 = vunpack.c.l.b16 %v260
    %v277 = vunpack.c.l.b16 %v261
    %v278 = vpack.c.b16 %v275, %v274
    %v279 = vpack.c.b16 %v277, %v276
    %282 = vmatprep.subr.bf16.mxu0 0
    %283 = vmatpush1.bf16.msra.mxu0 %v278
    %284 = vmatprep.subr.bf16.mxu0 0
    %285 = vmatpush1.bf16.msra.mxu0 %v279
    %286 = vmatprep.subr.bf16.mxu0 0
    %287 = vmatpush1.bf16.msra.mxu0 0
    %288 = vmatprep.subr.bf16.mxu0 0
    %289 = vmatpush1.bf16.msra.mxu0 0
    %290 = vmatprep.subr.bf16.mxu0 0
    %291 = vmatpush1.bf16.msra.mxu0 0
    %292 = vmatprep.subr.bf16.mxu0 0
    %293 = vmatpush1.bf16.msra.mxu0 0
    %294 = vmatprep.subr.bf16.mxu0 0
    %295 = vmatpush1.bf16.msra.mxu0 0
    %296 = vmatprep.subr.bf16.mxu0 0
    %297 = vmatpush1.bf16.msra.mxu0 0
    %298 = vmatprep.subr.bf16.mxu0 0
    %299 = vmatpush1.bf16.msra.mxu0 0
    %300 = vmatprep.subr.bf16.mxu0 0
    %301 = vmatpush1.bf16.msra.mxu0 0
    %302 = vmatprep.subr.bf16.mxu0 0
    %303 = vmatpush1.bf16.msra.mxu0 0
    %304 = vmatprep.subr.bf16.mxu0 0
    %305 = vmatpush1.bf16.msra.mxu0 0
    %306 = vmatprep.subr.bf16.mxu0 0
    %307 = vmatpush1.bf16.msra.mxu0 0
    %308 = vmatprep.subr.bf16.mxu0 0
    %309 = vmatpush1.bf16.msra.mxu0 0
    %310 = vmatprep.subr.bf16.mxu0 0
    %311 = vmatpush1.bf16.msra.mxu0 0
    %312 = vmatprep.subr.bf16.mxu0 0
    %313 = vmatpush1.bf16.msra.mxu0 0
    %314 = vmatprep.mubr.bf16.mxu0 0
    %315 = vmatmul.mubr.bf16.gmra.mrb[0].mxu0 %v127
    %v316 = vpop.f32.mrb[0].mxu0
    %v317 = vadd.f32 %v268, %v316
    %v318 = vpop.f32.mrb[0].mxu0
    %v319 = vpop.f32.mrb[0].mxu0
    %v320 = vadd.f32 %v268, %v319
    %v321 = vpop.f32.mrb[0].mxu0
    %322 = vdwg.mxu0
    %v323 = vpack.c.bf16 %v320, %v317
    %v325 = vunpack.c.l.b16 %v323
    %v326 = vunpack.c.h.b16 %v323
    %v327 = vpack.c.b16 %v325, %v325
    %v328 = vpack.c.b16 %v326, %v326
    %331 = vst.msk [vmem:[#allocation10] sm:$0xf] %vm178, %v327
    %332 = vst.msk [vmem:[#allocation10 + $0x4] sm:$0xf] %vm178, %v328
    // Predicated region
    $region30: #{tpu_custom_call.1} parent=1 // pred_check
      _
    $region31: #{tpu_custom_call.1} parent=1 // pred_check_branch
      %334 = sbr.rel (0) target = $region33
    $region32: #{tpu_custom_call.1} parent=1 // pred_region
      %s336 = ssub.s32 128, 128
      %337 = vsyncadd [#allocation4], %s336
      %s338 = sshll.u32 [#allocation7], 4
      %s339 = int_to_ptr.vmem [resolvable:$true] %s338
      %344 = dma.vmem_to_hbm [thread:$0]  %s339, 128, %s5, [#allocation4], 64, 64, 4
    $region33: #{tpu_custom_call.1} parent=1 // pred_fallthru
      _
    // Predicated region
    $region34: #{tpu_custom_call.1} parent=1 // pred_check
      _
    $region35: #{tpu_custom_call.1} parent=1 // pred_check_branch
      %346 = sbr.rel (0) target = $region37
    $region36: #{tpu_custom_call.1} parent=1 // pred_region
      %s348 = ssub.s32 128, 128
      %349 = vsyncadd [#allocation9], %s348
      %s350 = sshll.u32 [#allocation8], 4
      %s351 = int_to_ptr.vmem [resolvable:$true] %s350
      %356 = dma.vmem_to_hbm [thread:$0]  %s351, 128, %s6, [#allocation9], 64, 64, 4
    $region37: #{tpu_custom_call.1} parent=1 // pred_fallthru
      _
    // Predicated region
    $region38: #{tpu_custom_call.1} parent=1 // pred_check
      _
    $region39: #{tpu_custom_call.1} parent=1 // pred_check_branch
      %358 = sbr.rel (0) target = $region41
    $region40: #{tpu_custom_call.1} parent=1 // pred_region
      %s360 = ssub.s32 128, 128
      %361 = vsyncadd [#allocation9], %s360
      %s362 = sshll.u32 [#allocation10], 4
      %s363 = int_to_ptr.vmem [resolvable:$true] %s362
      %368 = dma.vmem_to_hbm [thread:$0]  %s363, 128, %s7, [#allocation9], 64, 64, 4
    $region41: #{tpu_custom_call.1} parent=1 // pred_fallthru
      _
    // Predicated region
    $region42: #{tpu_custom_call.1} parent=1 // pred_check
      _
    $region43: #{tpu_custom_call.1} parent=1 // pred_check_branch
      %370 = sbr.rel (0) target = $region45
    $region44: #{tpu_custom_call.1} parent=1 // pred_region
      %371 = dma.done [#allocation4], 128
    $region45: #{tpu_custom_call.1} parent=1 // pred_fallthru
      _
    // Predicated region
    $region46: #{tpu_custom_call.1} parent=1 // pred_check
      _
    $region47: #{tpu_custom_call.1} parent=1 // pred_check_branch
      %373 = sbr.rel (0) target = $region49
    $region48: #{tpu_custom_call.1} parent=1 // pred_region
      %374 = dma.done [#allocation9], 128
    $region49: #{tpu_custom_call.1} parent=1 // pred_fallthru
      _
    // Predicated region
    $region50: #{tpu_custom_call.1} parent=1 // pred_check
      _
    $region51: #{tpu_custom_call.1} parent=1 // pred_check_branch
      %376 = sbr.rel (0) target = $region53
    $region52: #{tpu_custom_call.1} parent=1 // pred_region
      %377 = dma.done [#allocation9], 128
    $region53: #{tpu_custom_call.1} parent=1 // pred_fallthru
      _
    %378 = vsyncpa [#allocation3], 1
    %379 = vsyncpa [#allocation6], 1
    %380 = vsyncpa [#allocation4], 1
    %381 = vsyncpa [#allocation9], 1

</llo_original>
